<compile_context>
chip_gen: v7x
topology: tpu7x:2x2x1
jax: 0.10.0
libtpu: 0.0.40
codegen_flags: <defaults>
</compile_context>

<pallas_src>
import functools

import jax
import jax.numpy as jnp
from jax import lax
from jax.experimental import pallas as pl
from jax.experimental.pallas import tpu as pltpu

_LANES = 128
_SUBLANES = 8
_TILE_ROWS = 2048            # 2048x128 f32 = 1 MiB per input block
_SINGLE_BLOCK_MAX_ROWS = 2048
_NUM_CORES = 2               # leading "parallel" grid axis (megacore split on v7x)


# --------------------------------------------------------------------------
# Kernel helpers
# --------------------------------------------------------------------------
def _bce_term_f32(p, t):
    """Per-element BCE with PyTorch's -100 log clamp (f32 compute)."""
    p = p.astype(jnp.float32)
    t = t.astype(jnp.float32)
    log_p = jnp.maximum(jnp.log(p), -100.0)
    log_1mp = jnp.maximum(jnp.log(1.0 - p), -100.0)
    # -(t*log p + (1-t)*log(1-p)) == t*(log(1-p) - log p) - log(1-p)
    return t * (log_1mp - log_p) - log_1mp


# --------------------------------------------------------------------------
# Kernels
# --------------------------------------------------------------------------
def _bce_sum_single_kernel(pred_ref, truth_ref, out_ref, *, n_elem):
    """Whole problem in one VMEM slab; scalar sum written to SMEM."""
    term = _bce_term_f32(pred_ref[...], truth_ref[...])
    rows, lanes = term.shape
    if rows * lanes != n_elem:  # static: only non-128-aligned inputs pay this
        row_idx = lax.broadcasted_iota(jnp.int32, term.shape, 0)
        lane_idx = lax.broadcasted_iota(jnp.int32, term.shape, 1)
        term = jnp.where(row_idx * lanes + lane_idx < n_elem, term, 0.0)
    out_ref[0, 0] = jnp.sum(term)


def _bce_sum_tiled_kernel(pred_ref, truth_ref, out_ref, acc_ref, *,
                          n_elem, n_tiles, tiles_per_core, mask_needed):
    """Streaming reduction: 2 cores x tiles_per_core grid, (8,128) accumulator."""
    c = pl.program_id(0)
    i = pl.program_id(1)
    tile_idx = c * tiles_per_core + i  # un-clamped logical tile index

    @pl.when(i == 0)
    def _():
        acc_ref[...] = jnp.zeros_like(acc_ref)

    term = _bce_term_f32(pred_ref[...], truth_ref[...])

    def _fold(x):
        # (TILE,128) -> (TILE//8, 8, 128) -> (8,128): pure VALU add tree.
        return x.reshape(-1, _SUBLANES, _LANES).sum(axis=0)

    if mask_needed:  # static: only emitted when the input is ragged / odd tiles
        is_edge = tile_idx >= n_tiles - 1

        @pl.when(jnp.logical_not(is_edge))
        def _():
            acc_ref[...] += _fold(term)

        @pl.when(is_edge)
        def _():
            # Mask out: (a) the ragged tail of the last real tile, (b) the whole
            # overshoot tile a core may re-visit when n_tiles is odd (its DMA is
            # clamped to the last tile in the index_map, its contribution is 0).
            row0 = tile_idx * _TILE_ROWS
            row_idx = row0 + lax.broadcasted_iota(jnp.int32, term.shape, 0)
            lane_idx = lax.broadcasted_iota(jnp.int32, term.shape, 1)
            mask = row_idx * _LANES + lane_idx < n_elem
            acc_ref[...] += _fold(jnp.where(mask, term, 0.0))
    else:
        acc_ref[...] += _fold(term)

    @pl.when(i == tiles_per_core - 1)
    def _():
        out_ref[...] = jnp.sum(acc_ref[...]).reshape(1, 1)


# --------------------------------------------------------------------------
# Wrapper
# --------------------------------------------------------------------------
def bce_loss_pallas(pred, truth):
    """Mean BCE loss over all elements, matching nn.BCELoss() defaults."""
    assert pred.shape == truth.shape
    n_elem = pred.size

    def _as_kernel_dtype(x):
        # bf16 / f32 pass through (no HBM copy); other dtypes upcast once.
        if x.dtype == jnp.float32 or x.dtype == jnp.bfloat16:
            return x
        return x.astype(jnp.float32)

    pred_flat = _as_kernel_dtype(pred).reshape(-1)
    truth_flat = _as_kernel_dtype(truth).reshape(-1)

    rows = pl.cdiv(n_elem, _LANES)
    pad_lanes = rows * _LANES - n_elem
    if pad_lanes:
        # TODO(synk): only non-128-aligned inputs pay this (at most 127-element)
        # pad copy; the padded tail is masked out in-kernel, no analytic fixup.
        pred_flat = jnp.concatenate(
            [pred_flat, jnp.full((pad_lanes,), 0.5, pred_flat.dtype)])
        truth_flat = jnp.concatenate(
            [truth_flat, jnp.zeros((pad_lanes,), truth_flat.dtype)])

    pred2d = pred_flat.reshape(rows, _LANES)
    truth2d = truth_flat.reshape(rows, _LANES)

    if rows <= _SINGLE_BLOCK_MAX_ROWS:
        # Small-shape path: single invocation, whole slabs in VMEM, SMEM scalar out.
        loss_sum = pl.pallas_call(
            functools.partial(_bce_sum_single_kernel, n_elem=n_elem),
            out_shape=jax.ShapeDtypeStruct((1, 1), jnp.float32),
            in_specs=[pl.BlockSpec(memory_space=pltpu.MemorySpace.VMEM)] * 2,
            out_specs=pl.BlockSpec(memory_space=pltpu.MemorySpace.SMEM),
        )(pred2d, truth2d)
        total = loss_sum[0, 0]
    else:
        # Large-N path: pipelined 2048-row tiles, split across 2 cores (v7x).
        n_tiles = pl.cdiv(rows, _TILE_ROWS)
        tiles_per_core = pl.cdiv(n_tiles, _NUM_CORES)
        mask_needed = (pad_lanes != 0
                       or rows % _TILE_ROWS != 0
                       or n_tiles != tiles_per_core * _NUM_CORES)

        def in_map(c, i):
            # Clamp so the DMA always targets a valid tile; the overshoot tile
            # (odd n_tiles) is zeroed out by the in-kernel mask.
            return (jnp.minimum(c * tiles_per_core + i, n_tiles - 1), 0)

        tile_spec = pl.BlockSpec((_TILE_ROWS, _LANES), in_map)
        out_spec = pl.BlockSpec((1, 1), lambda c, i: (c, 0))

        partials = pl.pallas_call(
            functools.partial(
                _bce_sum_tiled_kernel, n_elem=n_elem, n_tiles=n_tiles,
                tiles_per_core=tiles_per_core, mask_needed=mask_needed),
            out_shape=jax.ShapeDtypeStruct((_NUM_CORES, 1), jnp.float32),
            grid_spec=pltpu.PrefetchScalarGridSpec(
                num_scalar_prefetch=0,
                grid=(_NUM_CORES, tiles_per_core),
                in_specs=[tile_spec, tile_spec],
                out_specs=out_spec,
                scratch_shapes=[pltpu.VMEM((_SUBLANES, _LANES), jnp.float32)]),
            compiler_params=pltpu.CompilerParams(
                dimension_semantics=("parallel", "arbitrary")),
        )(pred2d, truth2d)
        total = jnp.sum(partials)

    return (total / n_elem).astype(jnp.float32)


# --------------------------------------------------------------------------
# Reference + test
# --------------------------------------------------------------------------
def _bce_ref(pred, truth):
    p = pred.astype(jnp.float32)
    t = truth.astype(jnp.float32)
    log_p = jnp.maximum(jnp.log(p), -100.0)
    log_1mp = jnp.maximum(jnp.log(1.0 - p), -100.0)
    return jnp.mean(-(t * log_p + (1.0 - t) * log_1mp))


if __name__ == "__main__":
    key = jax.random.PRNGKey(0)
    k1, k2, k3, k4 = jax.random.split(key, 4)

    # --- module's test shape: single-block path -----------------------------
    shape = (2, 4, 16, 16)
    pred = jax.nn.sigmoid(jax.random.normal(k1, shape, jnp.float32))
    truth = (jax.random.uniform(k2, shape) > 0.5).astype(jnp.float32)

    loss = bce_loss_pallas(pred, truth)
    jax.block_until_ready(loss)
    ref = _bce_ref(pred, truth)
    assert jnp.allclose(loss, ref, rtol=1e-5, atol=1e-6), (loss, ref)

    # --- ragged, larger shape: tiled 2-core path with in-kernel tail mask ---
    shape2 = (1, 3, 300, 301)  # 270900 elems -> 2117 rows -> 2 tiles, ragged
    pred2 = jax.nn.sigmoid(jax.random.normal(k3, shape2, jnp.float32))
    truth2 = (jax.random.uniform(k4, shape2) > 0.5).astype(jnp.float32)

    loss2 = bce_loss_pallas(pred2, truth2)
    jax.block_until_ready(loss2)
    ref2 = _bce_ref(pred2, truth2)
    assert jnp.allclose(loss2, ref2, rtol=1e-4, atol=1e-5), (loss2, ref2)

    print("KERNEL_OK")
</pallas_src>

<mosaic_0001>
module attributes {stable_mosaic.version = 11 : i64} {
  func.func @_bce_sum_single_kernel(%arg0: memref<16x128xf32, #tpu.memory_space<vmem>>, %arg1: memref<16x128xf32, #tpu.memory_space<vmem>>, %arg2: memref<1x1xf32, #tpu.memory_space<smem>>) attributes {dimension_semantics = [], scalar_prefetch = 0 : i64, scratch_operands = 0 : i64, tpu.core_type = #tpu.core_type<tc>} {
    %c0 = arith.constant 0 : index
    %c0_0 = arith.constant 0 : index
    %0 = vector.load %arg0[%c0, %c0_0] : memref<16x128xf32, #tpu.memory_space<vmem>>, vector<16x128xf32>
    %c0_1 = arith.constant 0 : index
    %c0_2 = arith.constant 0 : index
    %1 = vector.load %arg1[%c0_1, %c0_2] : memref<16x128xf32, #tpu.memory_space<vmem>>, vector<16x128xf32>
    %2 = math.log %0 : vector<16x128xf32>
    %cst = arith.constant -1.000000e+02 : f32
    %3 = vector.broadcast %cst : f32 to vector<16x128xf32>
    %4 = arith.maximumf %2, %3 : vector<16x128xf32>
    %cst_3 = arith.constant 1.000000e+00 : f32
    %5 = vector.broadcast %cst_3 : f32 to vector<16x128xf32>
    %6 = arith.subf %5, %0 : vector<16x128xf32>
    %7 = math.log %6 : vector<16x128xf32>
    %cst_4 = arith.constant -1.000000e+02 : f32
    %8 = vector.broadcast %cst_4 : f32 to vector<16x128xf32>
    %9 = arith.maximumf %7, %8 : vector<16x128xf32>
    %10 = arith.subf %9, %4 : vector<16x128xf32>
    %11 = arith.mulf %1, %10 : vector<16x128xf32>
    %12 = arith.subf %11, %9 : vector<16x128xf32>
    %13 = vector.shape_cast %12 : vector<16x128xf32> to vector<1x16x128xf32>
    %cst_5 = arith.constant dense<0.000000e+00> : vector<1xf32>
    %14 = vector.multi_reduction <add>, %13, %cst_5 [1, 2] : vector<1x16x128xf32> to vector<1xf32>
    %15 = vector.shape_cast %14 : vector<1xf32> to vector<1x1x1xf32>
    %16 = vector.extract %15[0, 0, 0] : f32 from vector<1x1x1xf32>
    %c0_6 = arith.constant 0 : index
    %c0_7 = arith.constant 0 : index
    %17 = memref.load %arg2[%c0_6, %c0_7] : memref<1x1xf32, #tpu.memory_space<smem>>
    memref.store %16, %arg2[%c0_6, %c0_7] : memref<1x1xf32, #tpu.memory_space<smem>>
    return
  }
}

</mosaic_0001>

<llo_original>
// kernel: tpu_custom_call.1
$region0: #{tpu_custom_call.1}
  #allocation0 [shape = 'u32[]', space=smem, size = 0x4, offset = 0x4, fixed_abs, tag = 'smem constant byte address 0x4 - core index']
  #allocation1 [shape = 'u32[144,128]{1,0:T(1,128)}', space=vmem, size = 0x12000, scoped, tag = 'internal scratch']
  %s0 = inlined_call_operand.hbm [shape: f32[16,128], index: 0, kind: input, shape index: {}]
  %s1 = inlined_call_operand.hbm [shape: f32[16,128], index: 1, kind: input, shape index: {}]
  %s2 = inlined_call_operand.hbm [shape: f32[1,1], index: 2, kind: output, shape index: {}]
  %s3 = sld [smem:[#allocation0]]
  $region26: #{tpu_custom_call.1} parent=0
    _
  %s5 = ssub.s32 1, %s3
  %s6 = scalar_select 0, %s5, %s3
  $region1: #{tpu_custom_call.1} parent=0
    #allocation2 [shape = 'u8[8192]{0}', space=vmem, size = 0x2000, scoped, tag = 'input window, operand 0, single buffered']
    #allocation3 [shape = 's32[1]{0}', space=sflag, size = 0x4, scoped, tag = 'scoped memory for tpu_custom_call.1']
    #allocation4 [shape = 's32[1]{0}', space=sflag, size = 0x4, scoped, tag = 'scoped memory for tpu_custom_call.1']
    #allocation5 [shape = 'u8[8192]{0}', space=vmem, size = 0x2000, scoped, tag = 'input window, operand 1, single buffered']
    #allocation6 [shape = 's32[1]{0}', space=sflag, size = 0x4, scoped, tag = 'scoped memory for tpu_custom_call.1']
    #allocation7 [shape = 'u8[512]{0}', space=smem, size = 0x200, scoped, tag = 'output window, operand 0, single buffered']
    %7 = vsyncpa [#allocation3], 0
    %8 = vsyncpa [#allocation6], 0
    %9 = vsyncpa [#allocation4], 0
    // Predicated region
    $region2: #{tpu_custom_call.1} parent=1 // pred_check
      _
    $region3: #{tpu_custom_call.1} parent=1 // pred_check_branch
      %11 = sbr.rel (0) target = $region5
    $region4: #{tpu_custom_call.1} parent=1 // pred_region
      %s13 = ssub.s32 256, 256
      %14 = vsyncadd [#allocation3], %s13
      %s15 = sshll.u32 [#allocation2], 4
      %s16 = int_to_ptr.vmem [resolvable:$true] %s15
      %21 = dma.hbm_to_vmem [thread:$0]  %s0, 256, %s16, [#allocation3], 128, 128, 8
    $region5: #{tpu_custom_call.1} parent=1 // pred_fallthru
      _
    // Predicated region
    $region6: #{tpu_custom_call.1} parent=1 // pred_check
      _
    $region7: #{tpu_custom_call.1} parent=1 // pred_check_branch
      %23 = sbr.rel (0) target = $region9
    $region8: #{tpu_custom_call.1} parent=1 // pred_region
      %s25 = ssub.s32 256, 256
      %26 = vsyncadd [#allocation6], %s25
      %s27 = sshll.u32 [#allocation5], 4
      %s28 = int_to_ptr.vmem [resolvable:$true] %s27
      %33 = dma.hbm_to_vmem [thread:$0]  %s1, 256, %s28, [#allocation6], 128, 128, 8
    $region9: #{tpu_custom_call.1} parent=1 // pred_fallthru
      _
    // Predicated region
    $region10: #{tpu_custom_call.1} parent=1 // pred_check
      _
    $region11: #{tpu_custom_call.1} parent=1 // pred_check_branch
      %35 = sbr.rel (0) target = $region13
    $region12: #{tpu_custom_call.1} parent=1 // pred_region
      %36 = dma.done [#allocation3], 256
    $region13: #{tpu_custom_call.1} parent=1 // pred_fallthru
      _
    // Predicated region
    $region14: #{tpu_custom_call.1} parent=1 // pred_check
      _
    $region15: #{tpu_custom_call.1} parent=1 // pred_check_branch
      %38 = sbr.rel (0) target = $region17
    $region16: #{tpu_custom_call.1} parent=1 // pred_region
      %39 = dma.done [#allocation6], 256
    $region17: #{tpu_custom_call.1} parent=1 // pred_fallthru
      _
    %v40 = vld [vmem:[#allocation2] sm:$0xff]
    %v41 = vld [vmem:[#allocation2 + $0x8] sm:$0xff]
    %v42 = vld [vmem:[#allocation5] sm:$0xff]
    %v43 = vld [vmem:[#allocation5 + $0x8] sm:$0xff]
    %v44 = vlog2.pop %v40
    %v45 = vmul.f32 %v44, 0.6931472
    %v46 = vlog2.pop %v41
    %v47 = vmul.f32 %v46, 0.6931472
    %v48 = vmax.f32 %v45, -100.0
    %v49 = vmax.f32 %v47, -100.0
    %v50 = vsub.f32 1.0, %v40
    %v51 = vsub.f32 1.0, %v41
    %v52 = vlog2.pop %v50
    %v53 = vmul.f32 %v52, 0.6931472
    %v54 = vlog2.pop %v51
    %v55 = vmul.f32 %v54, 0.6931472
    %v56 = vmax.f32 %v53, -100.0
    %v57 = vmax.f32 %v55, -100.0
    %v58 = vsub.f32 %v56, %v48
    %v59 = vsub.f32 %v57, %v49
    %v60 = vmul.f32 %v42, %v58
    %v61 = vmul.f32 %v43, %v59
    %v62 = vsub.f32 %v60, %v56
    %v63 = vsub.f32 %v61, %v57
    %v64 = vadd.f32 %v62, %v63
    %65 = vadd.xlane.f32.xlu0 %v64
    %v66 = vpop.xlane.xlu0 %65
    %v67 = vrot.slane %v66, 4
    %v68 = vadd.f32 %v66, %v67
    %v69 = vrot.slane %v68, 2
    %v70 = vadd.f32 %v68, %v69
    %v71 = vrot.slane %v70, 1
    %v72 = vadd.f32 %v70, %v71
    %s73 = vtos %v72
    %s74 = scalar_lea.smem [#allocation7], 0
    %75 = sst [smem:[%s74]] %s73
    // Predicated region
    $region18: #{tpu_custom_call.1} parent=1 // pred_check
      _
    $region19: #{tpu_custom_call.1} parent=1 // pred_check_branch
      %77 = sbr.rel (0) target = $region21
    $region20: #{tpu_custom_call.1} parent=1 // pred_region
      %s79 = ssub.s32 16, 16
      %80 = vsyncadd [#allocation4], %s79
      %83 = dma.smem_to_hbm [#allocation7], 16, %s2, [#allocation4]
    $region21: #{tpu_custom_call.1} parent=1 // pred_fallthru
      _
    // Predicated region
    $region22: #{tpu_custom_call.1} parent=1 // pred_check
      _
    $region23: #{tpu_custom_call.1} parent=1 // pred_check_branch
      %85 = sbr.rel (0) target = $region25
    $region24: #{tpu_custom_call.1} parent=1 // pred_region
      %86 = dma.done [#allocation4], 16
    $region25: #{tpu_custom_call.1} parent=1 // pred_fallthru
      _
    %87 = sfence
    %88 = vsyncpa [#allocation3], 1
    %89 = vsyncpa [#allocation6], 1
    %90 = vsyncpa [#allocation4], 1

</llo_original>
